<compile_context>
chip_gen: v6e
topology: v6e:2x2x1
jax: 0.10.0
libtpu: 0.0.40
codegen_flags: <defaults>
</compile_context>

<pallas_src>
import math

import jax
import jax.numpy as jnp
from jax import lax
from jax.experimental import pallas as pl
from jax.experimental.pallas import tpu as pltpu


# ----------------------------------------------------------------------------
# helpers
# ----------------------------------------------------------------------------
def _pick_tile(n, max_tile):
    """Largest tile <= max_tile that divides n and is 8-aligned, else n itself."""
    if n <= max_tile:
        return n
    for t in range(max_tile, 7, -1):
        if n % t == 0 and t % 8 == 0:
            return t
    return n


# ----------------------------------------------------------------------------
# RotaryEmbedding.forward(): batched embedding-table gather
# ----------------------------------------------------------------------------
def _embed_gather_kernel(idx_ref, table_hbm, out_ref, rows_vmem, sems):
    # idx_ref: scalar-prefetched token ids in SMEM
    # table_hbm: full embedding table left in HBM (memory_space=pl.ANY)
    # out_ref: (G, n_embd) VMEM output block
    i = pl.program_id(0)
    G = out_ref.shape[0]

    # Issue all G row-gather DMAs, then wait: G copies in flight per grid step.
    copies = []
    for g in range(G):
        row = idx_ref[i * G + g]
        cp = pltpu.make_async_copy(
            table_hbm.at[pl.ds(row, 1)],      # (1, n_embd) row of the table
            rows_vmem.at[pl.ds(g, 1)],        # (1, n_embd) slot in scratch
            sems.at[g],
        )
        cp.start()
        copies.append(cp)
    for cp in copies:
        cp.wait()

    out_ref[...] = rows_vmem[...]


def token_embedding(idx, emb_table, *, rows_per_step=8):
    """Equivalent of nn.Embedding(n_tok, n_embd)(idx) (norm_embed=False)."""
    B, S = idx.shape
    n_tok, n_embd = emb_table.shape
    G = rows_per_step

    idx_flat = idx.reshape(-1).astype(jnp.int32)
    BS = B * S
    n_pad = ((BS + G - 1) // G) * G
    if n_pad != BS:
        idx_flat = jnp.pad(idx_flat, (0, n_pad - BS))     # padded rows discarded
    n_tiles = n_pad // G

    out_flat = pl.pallas_call(
        _embed_gather_kernel,
        out_shape=jax.ShapeDtypeStruct((n_pad, n_embd), emb_table.dtype),
        grid_spec=pltpu.PrefetchScalarGridSpec(
            num_scalar_prefetch=1,
            grid=(n_tiles,),
            in_specs=[pl.BlockSpec(memory_space=pl.ANY)],          # table stays in HBM
            out_specs=pl.BlockSpec((G, n_embd), lambda i, idx_ref: (i, 0)),
            scratch_shapes=[
                pltpu.VMEM((G, n_embd), emb_table.dtype),
                pltpu.SemaphoreType.DMA((G,)),
            ],
        ),
        compiler_params=pltpu.CompilerParams(dimension_semantics=("parallel",)),
    )(idx_flat, emb_table)

    return out_flat[:BS].reshape(B, S, n_embd)


# ----------------------------------------------------------------------------
# RotaryEmbedding.rotary_embed(): tiled elementwise rotary kernel
# ----------------------------------------------------------------------------
def _rotary_kernel(q_ref, k_ref, cos_ref, sin_ref, qo_ref, ko_ref):
    # q_ref/k_ref blocks: (1, tile_s, Dh); cos/sin blocks: (tile_s, Dh)
    dh = q_ref.shape[-1]
    cos = cos_ref[...]
    sin_s = sin_ref[...]                      # sign already folded in (wrapper)
    q = q_ref[0]
    k = k_ref[0]
    # rotate(x) * sin == roll(x, Dh/2) * sin_signed  (roll runs on the XLU)
    qo_ref[0] = q * cos + pltpu.roll(q, shift=dh // 2, axis=1) * sin_s
    ko_ref[0] = k * cos + pltpu.roll(k, shift=dh // 2, axis=1) * sin_s


def _signed_sin(sin, dh):
    # rotate(x)[j] = -x[j+Dh/2] (j<Dh/2), +x[j-Dh/2] (j>=Dh/2)
    #             = roll(x, Dh/2)[j] * sign(j)  -> fold sign into the table.
    return jnp.concatenate([-sin[:, : dh // 2], sin[:, dh // 2:]], axis=-1)


def rotary_embed_pallas(q, k, cos_cached, sin_cached):
    B, H, S, Dh = q.shape
    assert S <= cos_cached.shape[0], "sequence longer than cached rotary tables"

    cos = cos_cached[:S, :]
    sin_s = _signed_sin(sin_cached[:S, :], Dh)

    qf = q.reshape(B * H, S, Dh)
    kf = k.reshape(B * H, S, Dh)

    tile_s = _pick_tile(S, 512)
    grid = (B * H, S // tile_s)

    qo, ko = pl.pallas_call(
        _rotary_kernel,
        out_shape=(
            jax.ShapeDtypeStruct(qf.shape, q.dtype),
            jax.ShapeDtypeStruct(kf.shape, k.dtype),
        ),
        grid_spec=pltpu.PrefetchScalarGridSpec(
            num_scalar_prefetch=0,
            grid=grid,
            in_specs=[
                pl.BlockSpec((1, tile_s, Dh), lambda bh, si: (bh, si, 0)),
                pl.BlockSpec((1, tile_s, Dh), lambda bh, si: (bh, si, 0)),
                pl.BlockSpec((tile_s, Dh), lambda bh, si: (si, 0)),   # cos
                pl.BlockSpec((tile_s, Dh), lambda bh, si: (si, 0)),   # signed sin
            ],
            out_specs=[
                pl.BlockSpec((1, tile_s, Dh), lambda bh, si: (bh, si, 0)),
                pl.BlockSpec((1, tile_s, Dh), lambda bh, si: (bh, si, 0)),
            ],
        ),
        compiler_params=pltpu.CompilerParams(
            dimension_semantics=("parallel", "parallel")),
    )(qf, kf, cos, sin_s)

    return qo.reshape(B, H, S, Dh), ko.reshape(B, H, S, Dh)


# ----------------------------------------------------------------------------
# Pallas row-tiled linear (used for c_attn / c_proj)
# ----------------------------------------------------------------------------
def _linear_kernel(x_ref, w_ref, b_ref, o_ref):
    o_ref[...] = (
        jnp.dot(x_ref[...], w_ref[...], preferred_element_type=jnp.float32)
        + b_ref[...]
    ).astype(o_ref.dtype)


def linear_pallas(x2d, w, b, *, block_m=256):
    M, K = x2d.shape
    _, N = w.shape
    bm = min(block_m, M)
    Mp = ((M + bm - 1) // bm) * bm
    if Mp != M:
        x2d = jnp.pad(x2d, ((0, Mp - M), (0, 0)))

    out = pl.pallas_call(
        _linear_kernel,
        out_shape=jax.ShapeDtypeStruct((Mp, N), x2d.dtype),
        grid_spec=pltpu.PrefetchScalarGridSpec(
            num_scalar_prefetch=0,
            grid=(Mp // bm,),
            in_specs=[
                pl.BlockSpec((bm, K), lambda i: (i, 0)),
                pl.BlockSpec((K, N), lambda i: (0, 0)),   # weights resident
                pl.BlockSpec((1, N), lambda i: (0, 0)),
            ],
            out_specs=pl.BlockSpec((bm, N), lambda i: (i, 0)),
        ),
        compiler_params=pltpu.CompilerParams(dimension_semantics=("parallel",)),
    )(x2d, w, b.reshape(1, N))
    return out[:M]


# ----------------------------------------------------------------------------
# RotarySelfAttention.forward(): fused rotary + causal flash attention
# ----------------------------------------------------------------------------
def _fused_rotary_attn_kernel(q_ref, k_ref, v_ref, cos_ref, sin_ref, o_ref,
                              qrot_sc, m_sc, l_sc, acc_sc):
    qi = pl.program_id(1)
    ki = pl.program_id(2)
    tq, dh = qrot_sc.shape
    tk = k_ref.shape[1]
    q_start = pl.multiple_of(qi * tq, tq)
    k_start = pl.multiple_of(ki * tk, tk)

    @pl.when(ki == 0)
    def _init():
        scale = 1.0 / math.sqrt(dh)
        q = q_ref[0]
        cos_q = cos_ref[pl.ds(q_start, tq), :]
        sin_q = sin_ref[pl.ds(q_start, tq), :]
        q_rot = q * cos_q + pltpu.roll(q, shift=dh // 2, axis=1) * sin_q
        qrot_sc[...] = q_rot.astype(jnp.float32) * scale    # rotate+scale q once
        m_sc[...] = jnp.full_like(m_sc, -jnp.inf)
        l_sc[...] = jnp.zeros_like(l_sc)
        acc_sc[...] = jnp.zeros_like(acc_sc)

    # skip kv tiles that are entirely above the causal diagonal
    @pl.when(k_start <= q_start + tq - 1)
    def _step():
        k = k_ref[0]
        cos_k = cos_ref[pl.ds(k_start, tk), :]
        sin_k = sin_ref[pl.ds(k_start, tk), :]
        k_rot = (k * cos_k
                 + pltpu.roll(k, shift=dh // 2, axis=1) * sin_k).astype(jnp.float32)

        # s = q_rot @ k_rot^T  (contract last dims; no explicit transpose)
        s = lax.dot_general(qrot_sc[...], k_rot,
                            dimension_numbers=(((1,), (1,)), ((), ())),
                            preferred_element_type=jnp.float32)   # (tq, tk)

        q_pos = q_start + lax.broadcasted_iota(jnp.int32, (tq, tk), 0)
        k_pos = k_start + lax.broadcasted_iota(jnp.int32, (tq, tk), 1)
        s = jnp.where(q_pos >= k_pos, s, -jnp.inf)

        m_new = jnp.maximum(m_sc[...], s.max(axis=-1, keepdims=True))
        alpha = jnp.exp(m_sc[...] - m_new)
        p = jnp.exp(s - m_new)
        l_sc[...] = alpha * l_sc[...] + p.sum(axis=-1, keepdims=True)
        acc_sc[...] = alpha * acc_sc[...] + jnp.dot(
            p, v_ref[0].astype(jnp.float32), preferred_element_type=jnp.float32)
        m_sc[...] = m_new

    @pl.when(ki == pl.num_programs(2) - 1)
    def _finish():
        inv_l = pl.reciprocal(l_sc[...], approx=False)
        o_ref[0] = (acc_sc[...] * inv_l).astype(o_ref.dtype)


def rotary_self_attention_pallas(x, w_attn, b_attn, w_proj, b_proj,
                                 cos_cached, sin_cached, n_head):
    B, T, C = x.shape
    assert C % n_head == 0
    Dh = C // n_head
    assert Dh % 2 == 0
    assert T <= cos_cached.shape[0], "sequence longer than cached rotary tables"

    # qkv projection (Pallas tiled linear)
    qkv = linear_pallas(x.reshape(B * T, C), w_attn, b_attn).reshape(B, T, 3 * C)
    q, k, v = jnp.split(qkv, 3, axis=-1)

    def to_heads(t):
        return (t.reshape(B, T, n_head, Dh)
                 .transpose(0, 2, 1, 3)
                 .reshape(B * n_head, T, Dh))

    q, k, v = to_heads(q), to_heads(k), to_heads(v)

    cos = cos_cached[:T, :]
    sin_s = _signed_sin(sin_cached[:T, :], Dh)

    tq = _pick_tile(T, 128)
    tk = _pick_tile(T, 128)
    grid = (B * n_head, T // tq, T // tk)

    y = pl.pallas_call(
        _fused_rotary_attn_kernel,
        out_shape=jax.ShapeDtypeStruct((B * n_head, T, Dh), x.dtype),
        grid_spec=pltpu.PrefetchScalarGridSpec(
            num_scalar_prefetch=0,
            grid=grid,
            in_specs=[
                pl.BlockSpec((1, tq, Dh), lambda bh, qi, ki: (bh, qi, 0)),  # q
                pl.BlockSpec((1, tk, Dh), lambda bh, qi, ki: (bh, ki, 0)),  # k
                pl.BlockSpec((1, tk, Dh), lambda bh, qi, ki: (bh, ki, 0)),  # v
                pl.BlockSpec((T, Dh), lambda bh, qi, ki: (0, 0)),           # cos
                pl.BlockSpec((T, Dh), lambda bh, qi, ki: (0, 0)),           # signed sin
            ],
            out_specs=pl.BlockSpec((1, tq, Dh), lambda bh, qi, ki: (bh, qi, 0)),
            scratch_shapes=[
                pltpu.VMEM((tq, Dh), jnp.float32),   # rotated+scaled q
                pltpu.VMEM((tq, 1), jnp.float32),    # running max
                pltpu.VMEM((tq, 1), jnp.float32),    # running denom
                pltpu.VMEM((tq, Dh), jnp.float32),   # output accumulator
            ],
        ),
        compiler_params=pltpu.CompilerParams(
            dimension_semantics=("parallel", "parallel", "arbitrary")),
    )(q, k, v, cos, sin_s)

    y = (y.reshape(B, n_head, T, Dh)
          .transpose(0, 2, 1, 3)
          .reshape(B, T, C))
    return linear_pallas(y.reshape(B * T, C), w_proj, b_proj).reshape(B, T, C)


# ----------------------------------------------------------------------------
# Module-equivalent parameter containers (deterministic)
# ----------------------------------------------------------------------------
class RotaryEmbeddingJAX:
    def __init__(self, n_seq=256, n_embd=128, n_tok=512, n_head=8, base=10000,
                 key=jax.random.PRNGKey(0)):
        assert n_embd % (2 * n_head) == 0
        head_dim = n_embd // n_head
        inv_freq = 1.0 / (base ** (jnp.arange(0, head_dim, 2, dtype=jnp.float32)
                                   / head_dim))
        t = jnp.arange(n_seq, dtype=jnp.float32)
        freqs = jnp.einsum("i,j->ij", t, inv_freq)
        emb = jnp.concatenate([freqs, freqs], axis=-1)
        self.cos_cached = jnp.cos(emb)
        self.sin_cached = jnp.sin(emb)
        self.n_head = n_head
        self.n_seq = n_seq
        self.n_embd = n_embd
        self.tok_emb_weight = jax.random.normal(key, (n_tok, n_embd), jnp.float32)

    def forward(self, idx):
        return token_embedding(idx, self.tok_emb_weight)

    def rotary_embed(self, q, k):
        return rotary_embed_pallas(q, k, self.cos_cached, self.sin_cached)


class RotarySelfAttentionJAX:
    def __init__(self, n_embd, n_head, keys):
        k_wa, k_ba, k_wp, k_bp = keys
        s = 1.0 / math.sqrt(n_embd)
        self.w_attn = jax.random.normal(k_wa, (n_embd, 3 * n_embd), jnp.float32) * s
        self.b_attn = jax.random.normal(k_ba, (3 * n_embd,), jnp.float32) * s
        self.w_proj = jax.random.normal(k_wp, (n_embd, n_embd), jnp.float32) * s
        self.b_proj = jax.random.normal(k_bp, (n_embd,), jnp.float32) * s
        self.n_head = n_head
        self.n_embd = n_embd

    def forward(self, x, rotary_embedding: RotaryEmbeddingJAX):
        return rotary_self_attention_pallas(
            x, self.w_attn, self.b_attn, self.w_proj, self.b_proj,
            rotary_embedding.cos_cached, rotary_embedding.sin_cached, self.n_head)


# ----------------------------------------------------------------------------
# Pure-JAX references
# ----------------------------------------------------------------------------
def _ref_embed(idx, table):
    return table[idx]


def _ref_rotary(q, k, cos_cached, sin_cached):
    s = q.shape[2]
    cos = cos_cached[None, None, :s, :]
    sin = sin_cached[None, None, :s, :]

    def rot(x):
        d = x.shape[-1]
        return jnp.concatenate([-x[..., d // 2:], x[..., : d // 2]], axis=-1)

    return q * cos + rot(q) * sin, k * cos + rot(k) * sin


def _ref_attention(x, w_attn, b_attn, w_proj, b_proj, cos_cached, sin_cached, n_head):
    B, T, C = x.shape
    Dh = C // n_head
    qkv = x @ w_attn + b_attn
    q, k, v = jnp.split(qkv, 3, axis=-1)

    def heads(t):
        return t.reshape(B, T, n_head, Dh).transpose(0, 2, 1, 3)

    q, k, v = heads(q), heads(k), heads(v)
    q, k = _ref_rotary(q, k, cos_cached, sin_cached)
    att = (q @ jnp.swapaxes(k, -1, -2)) * (1.0 / math.sqrt(Dh))
    mask = jnp.tril(jnp.ones((T, T), dtype=bool))
    att = jnp.where(mask[None, None], att, -jnp.inf)
    att = jax.nn.softmax(att, axis=-1)
    y = att @ v
    y = y.transpose(0, 2, 1, 3).reshape(B, T, C)
    return y @ w_proj + b_proj


# ----------------------------------------------------------------------------
# test
# ----------------------------------------------------------------------------
if __name__ == "__main__":
    # Small shapes; head_dim = 128 so the lane dimension is dense in every kernel.
    n_seq, n_embd, n_tok, n_head = 64, 256, 64, 2
    B, T = 2, 16
    Dh = n_embd // n_head

    key = jax.random.PRNGKey(0)
    k_emb, k_idx, k_q, k_k, k_x, k_wa, k_ba, k_wp, k_bp = jax.random.split(key, 9)

    rotary = RotaryEmbeddingJAX(n_seq=n_seq, n_embd=n_embd, n_tok=n_tok,
                                n_head=n_head, key=k_emb)
    attn = RotarySelfAttentionJAX(n_embd=n_embd, n_head=n_head,
                                  keys=(k_wa, k_ba, k_wp, k_bp))

    # 1) RotaryEmbedding.forward(): batched embedding gather
    idx = jax.random.randint(k_idx, (B, T), 0, n_tok, dtype=jnp.int32)
    emb = rotary.forward(idx)
    jax.block_until_ready(emb)
    assert jnp.allclose(emb, _ref_embed(idx, rotary.tok_emb_weight), atol=1e-6), \
        "embedding mismatch"

    # 2) RotaryEmbedding.rotary_embed(): standalone rotary kernel
    q = jax.random.normal(k_q, (B, n_head, T, Dh), dtype=jnp.float32)
    k = jax.random.normal(k_k, (B, n_head, T, Dh), dtype=jnp.float32)
    q_rot, k_rot = rotary.rotary_embed(q, k)
    jax.block_until_ready((q_rot, k_rot))
    rq, rk = _ref_rotary(q, k, rotary.cos_cached, rotary.sin_cached)
    assert jnp.allclose(q_rot, rq, atol=1e-5), "rotary q mismatch"
    assert jnp.allclose(k_rot, rk, atol=1e-5), "rotary k mismatch"

    # 3) RotarySelfAttention.forward(): fused rotary + causal attention
    x = jax.random.normal(k_x, (B, T, n_embd), dtype=jnp.float32)
    y = attn.forward(x, rotary)
    jax.block_until_ready(y)
    y_ref = _ref_attention(x, attn.w_attn, attn.b_attn, attn.w_proj, attn.b_proj,
                           rotary.cos_cached, rotary.sin_cached, n_head)
    assert jnp.allclose(y, y_ref, rtol=3e-2, atol=3e-2), "attention mismatch"

    print("KERNEL_OK")
</pallas_src>

<mosaic_0001>
module attributes {stable_mosaic.version = 11 : i64} {
  func.func @_embed_gather_kernel(%arg0: i32, %arg1: memref<32xi32, #tpu.memory_space<smem>>, %arg2: memref<64x256xf32, #tpu.memory_space<any>>, %arg3: memref<8x256xf32, #tpu.memory_space<vmem>>, %arg4: memref<8x256xf32, #tpu.memory_space<vmem>>, %arg5: memref<8x!tpu.dma_semaphore, #tpu.memory_space<semaphore_mem>>) attributes {dimension_semantics = [#tpu.dimension_semantics<parallel>], iteration_bounds = array<i64: 4>, scalar_prefetch = 1 : i64, scratch_operands = 2 : i64, tpu.core_type = #tpu.core_type<tc>, window_params = [{}, {transform_indices = @transform_1, window_bounds = array<i64: 8, 256>}]} {
    %c8_i32 = arith.constant 8 : i32
    %0 = arith.muli %arg0, %c8_i32 : i32
    %c0_i32 = arith.constant 0 : i32
    %1 = arith.addi %0, %c0_i32 : i32
    %2 = arith.index_cast %1 : i32 to index
    %3 = memref.load %arg1[%2] : memref<32xi32, #tpu.memory_space<smem>>
    %c0_i32_0 = arith.constant 0 : i32
    %c0_i32_1 = arith.constant 0 : i32
    %4 = tpu.memref_slice %arg2[%3, %c0_i32_1] : memref<64x256xf32, #tpu.memory_space<any>> -> memref<1x256xf32, #tpu.memory_space<any>>
    %c0_i32_2 = arith.constant 0 : i32
    %c0_i32_3 = arith.constant 0 : i32
    %5 = tpu.memref_slice %arg4[%c0_i32_2, %c0_i32_3] : memref<8x256xf32, #tpu.memory_space<vmem>> -> memref<1x256xf32, #tpu.memory_space<vmem>>
    %6 = tpu.memref_slice %arg5[%c0_i32_0] : memref<8x!tpu.dma_semaphore, #tpu.memory_space<semaphore_mem>> -> memref<1x!tpu.dma_semaphore, #tpu.memory_space<semaphore_mem>>
    %7 = tpu.memref_squeeze %6 : memref<1x!tpu.dma_semaphore, #tpu.memory_space<semaphore_mem>> -> memref<!tpu.dma_semaphore, #tpu.memory_space<semaphore_mem>>
    tpu.enqueue_dma source(%4 : memref<1x256xf32, #tpu.memory_space<any>>) target(%5 : memref<1x256xf32, #tpu.memory_space<vmem>>) target_semaphore(%7 : memref<!tpu.dma_semaphore, #tpu.memory_space<semaphore_mem>>)
    %c8_i32_4 = arith.constant 8 : i32
    %8 = arith.muli %arg0, %c8_i32_4 : i32
    %c1_i32 = arith.constant 1 : i32
    %9 = arith.addi %8, %c1_i32 : i32
    %10 = arith.index_cast %9 : i32 to index
    %11 = memref.load %arg1[%10] : memref<32xi32, #tpu.memory_space<smem>>
    %c1_i32_5 = arith.constant 1 : i32
    %c0_i32_6 = arith.constant 0 : i32
    %12 = tpu.memref_slice %arg2[%11, %c0_i32_6] : memref<64x256xf32, #tpu.memory_space<any>> -> memref<1x256xf32, #tpu.memory_space<any>>
    %c1_i32_7 = arith.constant 1 : i32
    %c0_i32_8 = arith.constant 0 : i32
    %13 = tpu.memref_slice %arg4[%c1_i32_7, %c0_i32_8] : memref<8x256xf32, #tpu.memory_space<vmem>> -> memref<1x256xf32, #tpu.memory_space<vmem>>
    %14 = tpu.memref_slice %arg5[%c1_i32_5] : memref<8x!tpu.dma_semaphore, #tpu.memory_space<semaphore_mem>> -> memref<1x!tpu.dma_semaphore, #tpu.memory_space<semaphore_mem>>
    %15 = tpu.memref_squeeze %14 : memref<1x!tpu.dma_semaphore, #tpu.memory_space<semaphore_mem>> -> memref<!tpu.dma_semaphore, #tpu.memory_space<semaphore_mem>>
    tpu.enqueue_dma source(%12 : memref<1x256xf32, #tpu.memory_space<any>>) target(%13 : memref<1x256xf32, #tpu.memory_space<vmem>>) target_semaphore(%15 : memref<!tpu.dma_semaphore, #tpu.memory_space<semaphore_mem>>)
    %c8_i32_9 = arith.constant 8 : i32
    %16 = arith.muli %arg0, %c8_i32_9 : i32
    %c2_i32 = arith.constant 2 : i32
    %17 = arith.addi %16, %c2_i32 : i32
    %18 = arith.index_cast %17 : i32 to index
    %19 = memref.load %arg1[%18] : memref<32xi32, #tpu.memory_space<smem>>
    %c2_i32_10 = arith.constant 2 : i32
    %c0_i32_11 = arith.constant 0 : i32
    %20 = tpu.memref_slice %arg2[%19, %c0_i32_11] : memref<64x256xf32, #tpu.memory_space<any>> -> memref<1x256xf32, #tpu.memory_space<any>>
    %c2_i32_12 = arith.constant 2 : i32
    %c0_i32_13 = arith.constant 0 : i32
    %21 = tpu.memref_slice %arg4[%c2_i32_12, %c0_i32_13] : memref<8x256xf32, #tpu.memory_space<vmem>> -> memref<1x256xf32, #tpu.memory_space<vmem>>
    %22 = tpu.memref_slice %arg5[%c2_i32_10] : memref<8x!tpu.dma_semaphore, #tpu.memory_space<semaphore_mem>> -> memref<1x!tpu.dma_semaphore, #tpu.memory_space<semaphore_mem>>
    %23 = tpu.memref_squeeze %22 : memref<1x!tpu.dma_semaphore, #tpu.memory_space<semaphore_mem>> -> memref<!tpu.dma_semaphore, #tpu.memory_space<semaphore_mem>>
    tpu.enqueue_dma source(%20 : memref<1x256xf32, #tpu.memory_space<any>>) target(%21 : memref<1x256xf32, #tpu.memory_space<vmem>>) target_semaphore(%23 : memref<!tpu.dma_semaphore, #tpu.memory_space<semaphore_mem>>)
    %c8_i32_14 = arith.constant 8 : i32
    %24 = arith.muli %arg0, %c8_i32_14 : i32
    %c3_i32 = arith.constant 3 : i32
    %25 = arith.addi %24, %c3_i32 : i32
    %26 = arith.index_cast %25 : i32 to index
    %27 = memref.load %arg1[%26] : memref<32xi32, #tpu.memory_space<smem>>
    %c3_i32_15 = arith.constant 3 : i32
    %c0_i32_16 = arith.constant 0 : i32
    %28 = tpu.memref_slice %arg2[%27, %c0_i32_16] : memref<64x256xf32, #tpu.memory_space<any>> -> memref<1x256xf32, #tpu.memory_space<any>>
    %c3_i32_17 = arith.constant 3 : i32
    %c0_i32_18 = arith.constant 0 : i32
    %29 = tpu.memref_slice %arg4[%c3_i32_17, %c0_i32_18] : memref<8x256xf32, #tpu.memory_space<vmem>> -> memref<1x256xf32, #tpu.memory_space<vmem>>
    %30 = tpu.memref_slice %arg5[%c3_i32_15] : memref<8x!tpu.dma_semaphore, #tpu.memory_space<semaphore_mem>> -> memref<1x!tpu.dma_semaphore, #tpu.memory_space<semaphore_mem>>
    %31 = tpu.memref_squeeze %30 : memref<1x!tpu.dma_semaphore, #tpu.memory_space<semaphore_mem>> -> memref<!tpu.dma_semaphore, #tpu.memory_space<semaphore_mem>>
    tpu.enqueue_dma source(%28 : memref<1x256xf32, #tpu.memory_space<any>>) target(%29 : memref<1x256xf32, #tpu.memory_space<vmem>>) target_semaphore(%31 : memref<!tpu.dma_semaphore, #tpu.memory_space<semaphore_mem>>)
    %c8_i32_19 = arith.constant 8 : i32
    %32 = arith.muli %arg0, %c8_i32_19 : i32
    %c4_i32 = arith.constant 4 : i32
    %33 = arith.addi %32, %c4_i32 : i32
    %34 = arith.index_cast %33 : i32 to index
    %35 = memref.load %arg1[%34] : memref<32xi32, #tpu.memory_space<smem>>
    %c4_i32_20 = arith.constant 4 : i32
    %c0_i32_21 = arith.constant 0 : i32
    %36 = tpu.memref_slice %arg2[%35, %c0_i32_21] : memref<64x256xf32, #tpu.memory_space<any>> -> memref<1x256xf32, #tpu.memory_space<any>>
    %c4_i32_22 = arith.constant 4 : i32
    %c0_i32_23 = arith.constant 0 : i32
    %37 = tpu.memref_slice %arg4[%c4_i32_22, %c0_i32_23] : memref<8x256xf32, #tpu.memory_space<vmem>> -> memref<1x256xf32, #tpu.memory_space<vmem>>
    %38 = tpu.memref_slice %arg5[%c4_i32_20] : memref<8x!tpu.dma_semaphore, #tpu.memory_space<semaphore_mem>> -> memref<1x!tpu.dma_semaphore, #tpu.memory_space<semaphore_mem>>
    %39 = tpu.memref_squeeze %38 : memref<1x!tpu.dma_semaphore, #tpu.memory_space<semaphore_mem>> -> memref<!tpu.dma_semaphore, #tpu.memory_space<semaphore_mem>>
    tpu.enqueue_dma source(%36 : memref<1x256xf32, #tpu.memory_space<any>>) target(%37 : memref<1x256xf32, #tpu.memory_space<vmem>>) target_semaphore(%39 : memref<!tpu.dma_semaphore, #tpu.memory_space<semaphore_mem>>)
    %c8_i32_24 = arith.constant 8 : i32
    %40 = arith.muli %arg0, %c8_i32_24 : i32
    %c5_i32 = arith.constant 5 : i32
    %41 = arith.addi %40, %c5_i32 : i32
    %42 = arith.index_cast %41 : i32 to index
    %43 = memref.load %arg1[%42] : memref<32xi32, #tpu.memory_space<smem>>
    %c5_i32_25 = arith.constant 5 : i32
    %c0_i32_26 = arith.constant 0 : i32
    %44 = tpu.memref_slice %arg2[%43, %c0_i32_26] : memref<64x256xf32, #tpu.memory_space<any>> -> memref<1x256xf32, #tpu.memory_space<any>>
    %c5_i32_27 = arith.constant 5 : i32
    %c0_i32_28 = arith.constant 0 : i32
    %45 = tpu.memref_slice %arg4[%c5_i32_27, %c0_i32_28] : memref<8x256xf32, #tpu.memory_space<vmem>> -> memref<1x256xf32, #tpu.memory_space<vmem>>
    %46 = tpu.memref_slice %arg5[%c5_i32_25] : memref<8x!tpu.dma_semaphore, #tpu.memory_space<semaphore_mem>> -> memref<1x!tpu.dma_semaphore, #tpu.memory_space<semaphore_mem>>
    %47 = tpu.memref_squeeze %46 : memref<1x!tpu.dma_semaphore, #tpu.memory_space<semaphore_mem>> -> memref<!tpu.dma_semaphore, #tpu.memory_space<semaphore_mem>>
    tpu.enqueue_dma source(%44 : memref<1x256xf32, #tpu.memory_space<any>>) target(%45 : memref<1x256xf32, #tpu.memory_space<vmem>>) target_semaphore(%47 : memref<!tpu.dma_semaphore, #tpu.memory_space<semaphore_mem>>)
    %c8_i32_29 = arith.constant 8 : i32
    %48 = arith.muli %arg0, %c8_i32_29 : i32
    %c6_i32 = arith.constant 6 : i32
    %49 = arith.addi %48, %c6_i32 : i32
    %50 = arith.index_cast %49 : i32 to index
    %51 = memref.load %arg1[%50] : memref<32xi32, #tpu.memory_space<smem>>
    %c6_i32_30 = arith.constant 6 : i32
    %c0_i32_31 = arith.constant 0 : i32
    %52 = tpu.memref_slice %arg2[%51, %c0_i32_31] : memref<64x256xf32, #tpu.memory_space<any>> -> memref<1x256xf32, #tpu.memory_space<any>>
    %c6_i32_32 = arith.constant 6 : i32
    %c0_i32_33 = arith.constant 0 : i32
    %53 = tpu.memref_slice %arg4[%c6_i32_32, %c0_i32_33] : memref<8x256xf32, #tpu.memory_space<vmem>> -> memref<1x256xf32, #tpu.memory_space<vmem>>
    %54 = tpu.memref_slice %arg5[%c6_i32_30] : memref<8x!tpu.dma_semaphore, #tpu.memory_space<semaphore_mem>> -> memref<1x!tpu.dma_semaphore, #tpu.memory_space<semaphore_mem>>
    %55 = tpu.memref_squeeze %54 : memref<1x!tpu.dma_semaphore, #tpu.memory_space<semaphore_mem>> -> memref<!tpu.dma_semaphore, #tpu.memory_space<semaphore_mem>>
    tpu.enqueue_dma source(%52 : memref<1x256xf32, #tpu.memory_space<any>>) target(%53 : memref<1x256xf32, #tpu.memory_space<vmem>>) target_semaphore(%55 : memref<!tpu.dma_semaphore, #tpu.memory_space<semaphore_mem>>)
    %c8_i32_34 = arith.constant 8 : i32
    %56 = arith.muli %arg0, %c8_i32_34 : i32
    %c7_i32 = arith.constant 7 : i32
    %57 = arith.addi %56, %c7_i32 : i32
    %58 = arith.index_cast %57 : i32 to index
    %59 = memref.load %arg1[%58] : memref<32xi32, #tpu.memory_space<smem>>
    %c7_i32_35 = arith.constant 7 : i32
    %c0_i32_36 = arith.constant 0 : i32
    %60 = tpu.memref_slice %arg2[%59, %c0_i32_36] : memref<64x256xf32, #tpu.memory_space<any>> -> memref<1x256xf32, #tpu.memory_space<any>>
    %c7_i32_37 = arith.constant 7 : i32
    %c0_i32_38 = arith.constant 0 : i32
    %61 = tpu.memref_slice %arg4[%c7_i32_37, %c0_i32_38] : memref<8x256xf32, #tpu.memory_space<vmem>> -> memref<1x256xf32, #tpu.memory_space<vmem>>
    %62 = tpu.memref_slice %arg5[%c7_i32_35] : memref<8x!tpu.dma_semaphore, #tpu.memory_space<semaphore_mem>> -> memref<1x!tpu.dma_semaphore, #tpu.memory_space<semaphore_mem>>
    %63 = tpu.memref_squeeze %62 : memref<1x!tpu.dma_semaphore, #tpu.memory_space<semaphore_mem>> -> memref<!tpu.dma_semaphore, #tpu.memory_space<semaphore_mem>>
    tpu.enqueue_dma source(%60 : memref<1x256xf32, #tpu.memory_space<any>>) target(%61 : memref<1x256xf32, #tpu.memory_space<vmem>>) target_semaphore(%63 : memref<!tpu.dma_semaphore, #tpu.memory_space<semaphore_mem>>)
    %c0_i32_39 = arith.constant 0 : i32
    %c0_i32_40 = arith.constant 0 : i32
    %64 = tpu.memref_slice %arg2[%3, %c0_i32_40] : memref<64x256xf32, #tpu.memory_space<any>> -> memref<1x256xf32, #tpu.memory_space<any>>
    %c0_i32_41 = arith.constant 0 : i32
    %c0_i32_42 = arith.constant 0 : i32
    %65 = tpu.memref_slice %arg4[%c0_i32_41, %c0_i32_42] : memref<8x256xf32, #tpu.memory_space<vmem>> -> memref<1x256xf32, #tpu.memory_space<vmem>>
    %66 = tpu.memref_slice %arg5[%c0_i32_39] : memref<8x!tpu.dma_semaphore, #tpu.memory_space<semaphore_mem>> -> memref<1x!tpu.dma_semaphore, #tpu.memory_space<semaphore_mem>>
    %67 = tpu.memref_squeeze %66 : memref<1x!tpu.dma_semaphore, #tpu.memory_space<semaphore_mem>> -> memref<!tpu.dma_semaphore, #tpu.memory_space<semaphore_mem>>
    tpu.wait_dma2 semaphore(%67 : memref<!tpu.dma_semaphore, #tpu.memory_space<semaphore_mem>>) src(%64 : memref<1x256xf32, #tpu.memory_space<any>>) dst(%65 : memref<1x256xf32, #tpu.memory_space<vmem>>)
    %c1_i32_43 = arith.constant 1 : i32
    %c0_i32_44 = arith.constant 0 : i32
    %68 = tpu.memref_slice %arg2[%11, %c0_i32_44] : memref<64x256xf32, #tpu.memory_space<any>> -> memref<1x256xf32, #tpu.memory_space<any>>
    %c1_i32_45 = arith.constant 1 : i32
    %c0_i32_46 = arith.constant 0 : i32
    %69 = tpu.memref_slice %arg4[%c1_i32_45, %c0_i32_46] : memref<8x256xf32, #tpu.memory_space<vmem>> -> memref<1x256xf32, #tpu.memory_space<vmem>>
    %70 = tpu.memref_slice %arg5[%c1_i32_43] : memref<8x!tpu.dma_semaphore, #tpu.memory_space<semaphore_mem>> -> memref<1x!tpu.dma_semaphore, #tpu.memory_space<semaphore_mem>>
    %71 = tpu.memref_squeeze %70 : memref<1x!tpu.dma_semaphore, #tpu.memory_space<semaphore_mem>> -> memref<!tpu.dma_semaphore, #tpu.memory_space<semaphore_mem>>
    tpu.wait_dma2 semaphore(%71 : memref<!tpu.dma_semaphore, #tpu.memory_space<semaphore_mem>>) src(%68 : memref<1x256xf32, #tpu.memory_space<any>>) dst(%69 : memref<1x256xf32, #tpu.memory_space<vmem>>)
    %c2_i32_47 = arith.constant 2 : i32
    %c0_i32_48 = arith.constant 0 : i32
    %72 = tpu.memref_slice %arg2[%19, %c0_i32_48] : memref<64x256xf32, #tpu.memory_space<any>> -> memref<1x256xf32, #tpu.memory_space<any>>
    %c2_i32_49 = arith.constant 2 : i32
    %c0_i32_50 = arith.constant 0 : i32
    %73 = tpu.memref_slice %arg4[%c2_i32_49, %c0_i32_50] : memref<8x256xf32, #tpu.memory_space<vmem>> -> memref<1x256xf32, #tpu.memory_space<vmem>>
    %74 = tpu.memref_slice %arg5[%c2_i32_47] : memref<8x!tpu.dma_semaphore, #tpu.memory_space<semaphore_mem>> -> memref<1x!tpu.dma_semaphore, #tpu.memory_space<semaphore_mem>>
    %75 = tpu.memref_squeeze %74 : memref<1x!tpu.dma_semaphore, #tpu.memory_space<semaphore_mem>> -> memref<!tpu.dma_semaphore, #tpu.memory_space<semaphore_mem>>
    tpu.wait_dma2 semaphore(%75 : memref<!tpu.dma_semaphore, #tpu.memory_space<semaphore_mem>>) src(%72 : memref<1x256xf32, #tpu.memory_space<any>>) dst(%73 : memref<1x256xf32, #tpu.memory_space<vmem>>)
    %c3_i32_51 = arith.constant 3 : i32
    %c0_i32_52 = arith.constant 0 : i32
    %76 = tpu.memref_slice %arg2[%27, %c0_i32_52] : memref<64x256xf32, #tpu.memory_space<any>> -> memref<1x256xf32, #tpu.memory_space<any>>
    %c3_i32_53 = arith.constant 3 : i32
    %c0_i32_54 = arith.constant 0 : i32
    %77 = tpu.memref_slice %arg4[%c3_i32_53, %c0_i32_54] : memref<8x256xf32, #tpu.memory_space<vmem>> -> memref<1x256xf32, #tpu.memory_space<vmem>>
    %78 = tpu.memref_slice %arg5[%c3_i32_51] : memref<8x!tpu.dma_semaphore, #tpu.memory_space<semaphore_mem>> -> memref<1x!tpu.dma_semaphore, #tpu.memory_space<semaphore_mem>>
    %79 = tpu.memref_squeeze %78 : memref<1x!tpu.dma_semaphore, #tpu.memory_space<semaphore_mem>> -> memref<!tpu.dma_semaphore, #tpu.memory_space<semaphore_mem>>
    tpu.wait_dma2 semaphore(%79 : memref<!tpu.dma_semaphore, #tpu.memory_space<semaphore_mem>>) src(%76 : memref<1x256xf32, #tpu.memory_space<any>>) dst(%77 : memref<1x256xf32, #tpu.memory_space<vmem>>)
    %c4_i32_55 = arith.constant 4 : i32
    %c0_i32_56 = arith.constant 0 : i32
    %80 = tpu.memref_slice %arg2[%35, %c0_i32_56] : memref<64x256xf32, #tpu.memory_space<any>> -> memref<1x256xf32, #tpu.memory_space<any>>
    %c4_i32_57 = arith.constant 4 : i32
    %c0_i32_58 = arith.constant 0 : i32
    %81 = tpu.memref_slice %arg4[%c4_i32_57, %c0_i32_58] : memref<8x256xf32, #tpu.memory_space<vmem>> -> memref<1x256xf32, #tpu.memory_space<vmem>>
    %82 = tpu.memref_slice %arg5[%c4_i32_55] : memref<8x!tpu.dma_semaphore, #tpu.memory_space<semaphore_mem>> -> memref<1x!tpu.dma_semaphore, #tpu.memory_space<semaphore_mem>>
    %83 = tpu.memref_squeeze %82 : memref<1x!tpu.dma_semaphore, #tpu.memory_space<semaphore_mem>> -> memref<!tpu.dma_semaphore, #tpu.memory_space<semaphore_mem>>
    tpu.wait_dma2 semaphore(%83 : memref<!tpu.dma_semaphore, #tpu.memory_space<semaphore_mem>>) src(%80 : memref<1x256xf32, #tpu.memory_space<any>>) dst(%81 : memref<1x256xf32, #tpu.memory_space<vmem>>)
    %c5_i32_59 = arith.constant 5 : i32
    %c0_i32_60 = arith.constant 0 : i32
    %84 = tpu.memref_slice %arg2[%43, %c0_i32_60] : memref<64x256xf32, #tpu.memory_space<any>> -> memref<1x256xf32, #tpu.memory_space<any>>
    %c5_i32_61 = arith.constant 5 : i32
    %c0_i32_62 = arith.constant 0 : i32
    %85 = tpu.memref_slice %arg4[%c5_i32_61, %c0_i32_62] : memref<8x256xf32, #tpu.memory_space<vmem>> -> memref<1x256xf32, #tpu.memory_space<vmem>>
    %86 = tpu.memref_slice %arg5[%c5_i32_59] : memref<8x!tpu.dma_semaphore, #tpu.memory_space<semaphore_mem>> -> memref<1x!tpu.dma_semaphore, #tpu.memory_space<semaphore_mem>>
    %87 = tpu.memref_squeeze %86 : memref<1x!tpu.dma_semaphore, #tpu.memory_space<semaphore_mem>> -> memref<!tpu.dma_semaphore, #tpu.memory_space<semaphore_mem>>
    tpu.wait_dma2 semaphore(%87 : memref<!tpu.dma_semaphore, #tpu.memory_space<semaphore_mem>>) src(%84 : memref<1x256xf32, #tpu.memory_space<any>>) dst(%85 : memref<1x256xf32, #tpu.memory_space<vmem>>)
    %c6_i32_63 = arith.constant 6 : i32
    %c0_i32_64 = arith.constant 0 : i32
    %88 = tpu.memref_slice %arg2[%51, %c0_i32_64] : memref<64x256xf32, #tpu.memory_space<any>> -> memref<1x256xf32, #tpu.memory_space<any>>
    %c6_i32_65 = arith.constant 6 : i32
    %c0_i32_66 = arith.constant 0 : i32
    %89 = tpu.memref_slice %arg4[%c6_i32_65, %c0_i32_66] : memref<8x256xf32, #tpu.memory_space<vmem>> -> memref<1x256xf32, #tpu.memory_space<vmem>>
    %90 = tpu.memref_slice %arg5[%c6_i32_63] : memref<8x!tpu.dma_semaphore, #tpu.memory_space<semaphore_mem>> -> memref<1x!tpu.dma_semaphore, #tpu.memory_space<semaphore_mem>>
    %91 = tpu.memref_squeeze %90 : memref<1x!tpu.dma_semaphore, #tpu.memory_space<semaphore_mem>> -> memref<!tpu.dma_semaphore, #tpu.memory_space<semaphore_mem>>
    tpu.wait_dma2 semaphore(%91 : memref<!tpu.dma_semaphore, #tpu.memory_space<semaphore_mem>>) src(%88 : memref<1x256xf32, #tpu.memory_space<any>>) dst(%89 : memref<1x256xf32, #tpu.memory_space<vmem>>)
    %c7_i32_67 = arith.constant 7 : i32
    %c0_i32_68 = arith.constant 0 : i32
    %92 = tpu.memref_slice %arg2[%59, %c0_i32_68] : memref<64x256xf32, #tpu.memory_space<any>> -> memref<1x256xf32, #tpu.memory_space<any>>
    %c7_i32_69 = arith.constant 7 : i32
    %c0_i32_70 = arith.constant 0 : i32
    %93 = tpu.memref_slice %arg4[%c7_i32_69, %c0_i32_70] : memref<8x256xf32, #tpu.memory_space<vmem>> -> memref<1x256xf32, #tpu.memory_space<vmem>>
    %94 = tpu.memref_slice %arg5[%c7_i32_67] : memref<8x!tpu.dma_semaphore, #tpu.memory_space<semaphore_mem>> -> memref<1x!tpu.dma_semaphore, #tpu.memory_space<semaphore_mem>>
    %95 = tpu.memref_squeeze %94 : memref<1x!tpu.dma_semaphore, #tpu.memory_space<semaphore_mem>> -> memref<!tpu.dma_semaphore, #tpu.memory_space<semaphore_mem>>
    tpu.wait_dma2 semaphore(%95 : memref<!tpu.dma_semaphore, #tpu.memory_space<semaphore_mem>>) src(%92 : memref<1x256xf32, #tpu.memory_space<any>>) dst(%93 : memref<1x256xf32, #tpu.memory_space<vmem>>)
    %c0 = arith.constant 0 : index
    %c0_71 = arith.constant 0 : index
    %96 = vector.load %arg4[%c0, %c0_71] : memref<8x256xf32, #tpu.memory_space<vmem>>, vector<8x256xf32>
    %c0_72 = arith.constant 0 : index
    %c0_73 = arith.constant 0 : index
    %97 = vector.load %arg3[%c0_72, %c0_73] : memref<8x256xf32, #tpu.memory_space<vmem>>, vector<8x256xf32>
    tpu.vector_store %arg3[%c0_72, %c0_73], %96 {strides = array<i32>} : memref<8x256xf32, #tpu.memory_space<vmem>>, vector<8x256xf32>,
    return
  }
  func.func @transform_1(%arg0: i32, %arg1: memref<32xi32, #tpu.memory_space<smem>>) -> (i32, i32) {
    %c0_i32 = arith.constant 0 : i32
    %c0_i32_0 = arith.constant 0 : i32
    return %arg0, %c0_i32 : i32, i32
  }
}

</mosaic_0001>

<llo_original>
// kernel: tpu_custom_call.1
$region0: #{tpu_custom_call.1}
  #allocation0 [shape = 'u32[]', space=smem, size = 0x4, offset = 0x4, fixed_abs, tag = 'smem constant byte address 0x4 - core index']
  #allocation1 [shape = 'u32[144,128]{1,0:T(1,128)}', space=vmem, size = 0x12000, scoped, tag = 'internal scratch']
  #allocation2 [shape = 'f32[8,256]{1,0:T(8,128)}', space=vmem, size = 0x2000, scoped, tag = 'scratch operand']
  #allocation3 [shape = 's32[8]{0}', space=sflag, size = 0x20, scoped, tag = 'scratch operand']
  #allocation4 [shape = 's32[1]{0}', space=sflag, size = 0x4, scoped, tag = 'scoped memory for tpu_custom_call.1']
  #allocation5 [shape = 'u8[512]{0}', space=smem, size = 0x200, scoped, tag = 'prefetched SMEM operand 0']
  #allocation8 [shape = 's32[]', space=sflag, size = 0x4, offset = 0, fixed_abs, tag = 'sflag constant byte address 0x0 - dummy sync flag']
  #allocation9 [shape = 's32[]', space=sflag, size = 0x4, offset = 0, fixed_abs, tag = 'sflag constant byte address 0x0 - dummy sync flag']
  #allocation10 [shape = 's32[]', space=sflag, size = 0x4, offset = 0, fixed_abs, tag = 'sflag constant byte address 0x0 - dummy sync flag']
  #allocation11 [shape = 's32[]', space=sflag, size = 0x4, offset = 0, fixed_abs, tag = 'sflag constant byte address 0x0 - dummy sync flag']
  #allocation12 [shape = 's32[]', space=sflag, size = 0x4, offset = 0, fixed_abs, tag = 'sflag constant byte address 0x0 - dummy sync flag']
  #allocation13 [shape = 's32[]', space=sflag, size = 0x4, offset = 0, fixed_abs, tag = 'sflag constant byte address 0x0 - dummy sync flag']
  #allocation14 [shape = 's32[]', space=sflag, size = 0x4, offset = 0, fixed_abs, tag = 'sflag constant byte address 0x0 - dummy sync flag']
  #allocation15 [shape = 's32[]', space=sflag, size = 0x4, offset = 0, fixed_abs, tag = 'sflag constant byte address 0x0 - dummy sync flag']
  %s0 = inlined_call_operand.hbm [shape: s32[32], index: 0, kind: input, shape index: {}]
  %s1 = inlined_call_operand.hbm [shape: f32[64,256], index: 1, kind: input, shape index: {}]
  %s2 = inlined_call_operand.hbm [shape: f32[32,256], index: 2, kind: output, shape index: {}]
  %s3 = sld [smem:[#allocation0]]
  $region25: #{tpu_custom_call.1} parent=0
    _
  %s5 = ssub.s32 1, %s3
  %s6 = scalar_select 0, %s5, %s3
  %8 = dma.hbm_to_smem %s0, 16, [#allocation5], [#allocation4]
  %9 = dma.done [#allocation4], 16
  %10 = sfence
  $region1: #{tpu_custom_call.1} parent=0
    #allocation6 [shape = 'u8[16384]{0}', space=vmem, size = 0x4000, scoped, tag = 'output window, operand 0']
    #allocation7 [shape = 's32[2]{0}', space=sflag, size = 0x8, scoped, tag = 'scoped memory for tpu_custom_call.1']
    %11 = vsyncpa [#allocation7], 0
    %s12 = scalar_lea.sflag [#allocation7], 1
    %13 = vsyncpa %s12, 0
    loop: start=0, step=1, limit=5
    $region2: #{tpu_custom_call.1} parent=1 // loop_pre_header
      _
    $region3: #{tpu_custom_call.1} parent=1 // loop_header
      %s15 = sphi 0, %s19
      %p16 = scmp.ge.s32.totalorder %s15, 5
      %s24 = sphi 0, %s26
      %s27 = sphi 0, %s24
      %s37 = sphi 0, %s27
    $region4: #{tpu_custom_call.1} parent=1 // loop_header_branch
      %18 = sbr.rel (%p16) target = $region8
    $region5: #{tpu_custom_call.1} parent=1 // loop_body
      %s20 = ssub.s32 %s15, 1
      %s21 = sadd.s32 %s15, 1
      %s22 = ssub.s32 %s15, %s21
      %p23 = scmp.eq.s32.totalorder %s22, 0
      %s25 = sadd.s32 %s24, 1
      %s26 = scalar_select %p23, %s24, %s25
      %p28 = pneg %p23
      %p29 = scmp.eq.s32.totalorder %s15, 3
      %p30 = por %p28, %p29
      %p31 = scmp.ne.s32.totalorder %s24, %s27
      %p32 = scmp.eq.s32.totalorder %s15, 0
      %p33 = por %p31, %p32
      %p34 = scmp.ne.s32.totalorder %s24, %s27
      %p35 = scmp.eq.s32.totalorder %s20, 3
      %p36 = por %p34, %p35
      %p38 = scmp.ne.s32.totalorder %s27, %s37
      %p39 = scmp.eq.s32.totalorder %s20, 0
      %p40 = por %p38, %p39
      %p41 = scmp.lt.s32.totalorder %s15, 4
      // Predicated region
      $region9: #{tpu_custom_call.1} parent=5 // pred_check
        %p42 = pneg %p41
      $region10: #{tpu_custom_call.1} parent=5 // pred_check_branch
        %44 = sbr.rel (%p42) target = $region12
      $region11: #{tpu_custom_call.1} parent=5 // pred_region
        %p45 = pneg %p33
        %p46 = pneg %p30
        %s47 = sand.u32 %s24, 1
        %s48 = scalar_lea.sflag [#allocation7], %s47
        %s49 = sand.u32 %s24, 1
        %s50 = smul.addr %s49, 16
        %s51 = scalar_lea.vmem [#allocation6], %s50
        %s52 = smul.u32 %s15, 8
        %s53 = sld [smem:[#allocation5 + %s52]]
        %s54 = sshrl.u32 %s53, 3
        %s55 = sand.u32 %s53, 7
        %s56 = smul.u32 %s54, 16
        %s57 = sadd.s32 %s55, %s56
        %s58 = smul.addr %s57, 16
        %s59 = scalar_lea.hbm %s1, %s58
        %s61 = sshll.u32 [#allocation2], 4
        %s62 = int_to_ptr.vmem [resolvable:$true] %s61
        %64 = dma.hbm_to_vmem [thread:$0]  %s59, 32, %s62, [#allocation3], 128, 128, 1
        %s65 = sadd.s32 %s52, 1
        %s66 = sld [smem:[#allocation5 + %s65]]
        %s67 = sshrl.u32 %s66, 3
        %s68 = sand.u32 %s66, 7
        %s69 = smul.u32 %s67, 16
        %s70 = sadd.s32 %s68, %s69
        %s71 = smul.addr %s70, 16
        %s72 = scalar_lea.hbm %s1, %s71
        %s73 = scalar_lea.vmem [#allocation2], 1
        %s74 = scalar_lea.sflag [#allocation3], 1
        %s76 = sshll.u32 %s73, 4
        %s77 = int_to_ptr.vmem [resolvable:$true] %s76
        %79 = dma.hbm_to_vmem [thread:$0]  %s72, 32, %s77, %s74, 128, 128, 1
        %s80 = sadd.s32 %s52, 2
        %s81 = sld [smem:[#allocation5 + %s80]]
        %s82 = sshrl.u32 %s81, 3
        %s83 = sand.u32 %s81, 7
        %s84 = smul.u32 %s82, 16
        %s85 = sadd.s32 %s83, %s84
        %s86 = smul.addr %s85, 16
        %s87 = scalar_lea.hbm %s1, %s86
        %s88 = scalar_lea.vmem [#allocation2], 2
        %s89 = scalar_lea.sflag [#allocation3], 2
        %s91 = sshll.u32 %s88, 4
        %s92 = int_to_ptr.vmem [resolvable:$true] %s91
        %94 = dma.hbm_to_vmem [thread:$0]  %s87, 32, %s92, %s89, 128, 128, 1
        %s95 = sadd.s32 %s52, 3
        %s96 = sld [smem:[#allocation5 + %s95]]
        %s97 = sshrl.u32 %s96, 3
        %s98 = sand.u32 %s96, 7
        %s99 = smul.u32 %s97, 16
        %s100 = sadd.s32 %s98, %s99
        %s101 = smul.addr %s100, 16
        %s102 = scalar_lea.hbm %s1, %s101
        %s103 = scalar_lea.vmem [#allocation2], 3
        %s104 = scalar_lea.sflag [#allocation3], 3
        %s106 = sshll.u32 %s103, 4
        %s107 = int_to_ptr.vmem [resolvable:$true] %s106
        %109 = dma.hbm_to_vmem [thread:$0]  %s102, 32, %s107, %s104, 128, 128, 1
        %s110 = sadd.s32 %s52, 4
        %s111 = sld [smem:[#allocation5 + %s110]]
        %s112 = sshrl.u32 %s111, 3
        %s113 = sand.u32 %s111, 7
        %s114 = smul.u32 %s112, 16
        %s115 = sadd.s32 %s113, %s114
        %s116 = smul.addr %s115, 16
        %s117 = scalar_lea.hbm %s1, %s116
        %s118 = scalar_lea.vmem [#allocation2], 4
        %s119 = scalar_lea.sflag [#allocation3], 4
        %s121 = sshll.u32 %s118, 4
        %s122 = int_to_ptr.vmem [resolvable:$true] %s121
        %124 = dma.hbm_to_vmem [thread:$0]  %s117, 32, %s122, %s119, 128, 128, 1
        %s125 = sadd.s32 %s52, 5
        %s126 = sld [smem:[#allocation5 + %s125]]
        %s127 = sshrl.u32 %s126, 3
        %s128 = sand.u32 %s126, 7
        %s129 = smul.u32 %s127, 16
        %s130 = sadd.s32 %s128, %s129
        %s131 = smul.addr %s130, 16
        %s132 = scalar_lea.hbm %s1, %s131
        %s133 = scalar_lea.vmem [#allocation2], 5
        %s134 = scalar_lea.sflag [#allocation3], 5
        %s136 = sshll.u32 %s133, 4
        %s137 = int_to_ptr.vmem [resolvable:$true] %s136
        %139 = dma.hbm_to_vmem [thread:$0]  %s132, 32, %s137, %s134, 128, 128, 1
        %s140 = sadd.s32 %s52, 6
        %s141 = sld [smem:[#allocation5 + %s140]]
        %s142 = sshrl.u32 %s141, 3
        %s143 = sand.u32 %s141, 7
        %s144 = smul.u32 %s142, 16
        %s145 = sadd.s32 %s143, %s144
        %s146 = smul.addr %s145, 16
        %s147 = scalar_lea.hbm %s1, %s146
        %s148 = scalar_lea.vmem [#allocation2], 6
        %s149 = scalar_lea.sflag [#allocation3], 6
        %s151 = sshll.u32 %s148, 4
        %s152 = int_to_ptr.vmem [resolvable:$true] %s151
        %154 = dma.hbm_to_vmem [thread:$0]  %s147, 32, %s152, %s149, 128, 128, 1
        %s155 = sadd.s32 %s52, 7
        %s156 = sld [smem:[#allocation5 + %s155]]
        %s157 = sshrl.u32 %s156, 3
        %s158 = sand.u32 %s156, 7
        %s159 = smul.u32 %s157, 16
        %s160 = sadd.s32 %s158, %s159
        %s161 = smul.addr %s160, 16
        %s162 = scalar_lea.hbm %s1, %s161
        %s163 = scalar_lea.vmem [#allocation2], 7
        %s164 = scalar_lea.sflag [#allocation3], 7
        %s166 = sshll.u32 %s163, 4
        %s167 = int_to_ptr.vmem [resolvable:$true] %s166
        %169 = dma.hbm_to_vmem [thread:$0]  %s162, 32, %s167, %s164, 128, 128, 1
        %s170 = smul.u32 1, 2
        %s171 = sshll.u32 %s170, 4
        %172 = dma.done [#allocation3], %s171
        %s173 = sshll.u32 %s170, 4
        %174 = dma.done %s74, %s173
        %s175 = sshll.u32 %s170, 4
        %176 = dma.done %s89, %s175
        %s177 = sshll.u32 %s170, 4
        %178 = dma.done %s104, %s177
        %s179 = sshll.u32 %s170, 4
        %180 = dma.done %s119, %s179
        %s181 = sshll.u32 %s170, 4
        %182 = dma.done %s134, %s181
        %s183 = sshll.u32 %s170, 4
        %184 = dma.done %s149, %s183
        %s185 = sshll.u32 %s170, 4
        %186 = dma.done %s164, %s185
        %v187 = vld [vmem:[#allocation2] sm:$0xff]
        %v188 = vld [vmem:[#allocation2 + $0x8] sm:$0xff]
        %189 = vst [vmem:[%s51] sm:$0xff] %v187
        %190 = vst [vmem:[%s51 + $0x8] sm:$0xff] %v188
        %s191 = sand.u32 %s24, 1
        %s192 = scalar_lea.sflag [#allocation7], %s191
        %s193 = sand.u32 %s24, 1
        %s194 = smul.addr %s193, 16
        %s195 = scalar_lea.vmem [#allocation6], %s194
        // Predicated region
        $region13: #{tpu_custom_call.1} parent=11 // pred_check
          %p196 = pneg %p30
        $region14: #{tpu_custom_call.1} parent=11 // pred_check_branch
          %198 = sbr.rel (%p196) target = $region16
        $region15: #{tpu_custom_call.1} parent=11 // pred_region
          %s200 = ssub.s32 256, 256
          %201 = vsyncadd %s192, %s200
          %s202 = smul.addr %s15, 2
          %s203 = smul.addr %s202, 128
          %s204 = scalar_lea.hbm %s2, %s203
          %s206 = sshll.u32 %s195, 4
          %s207 = int_to_ptr.vmem [resolvable:$true] %s206
          %209 = dma.vmem_to_hbm [thread:$0]  %s207, 256, %s204, %s192
        $region16: #{tpu_custom_call.1} parent=11 // pred_fallthru
          _
      $region12: #{tpu_custom_call.1} parent=5 // pred_fallthru
        _
      %p210 = scmp.le.s32.totalorder 1, %s15
      // Predicated region
      $region17: #{tpu_custom_call.1} parent=5 // pred_check
        %p211 = pneg %p210
      $region18: #{tpu_custom_call.1} parent=5 // pred_check_branch
        %213 = sbr.rel (%p211) target = $region20
      $region19: #{tpu_custom_call.1} parent=5 // pred_region
        %s214 = ssub.s32 %s15, 1
        // Predicated region
        $region21: #{tpu_custom_call.1} parent=19 // pred_check
          %p215 = pneg %p36
        $region22: #{tpu_custom_call.1} parent=19 // pred_check_branch
          %217 = sbr.rel (%p215) target = $region24
        $region23: #{tpu_custom_call.1} parent=19 // pred_region
          %s218 = sand.u32 %s27, 1
          %s219 = scalar_lea.sflag [#allocation7], %s218
          %s220 = sand.u32 %s27, 1
          %s221 = smul.addr %s220, 16
          %s222 = scalar_lea.vmem [#allocation6], %s221
          %223 = dma.done %s219, 256
        $region24: #{tpu_custom_call.1} parent=19 // pred_fallthru
          _
      $region20: #{tpu_custom_call.1} parent=5 // pred_fallthru
        _
    $region6: #{tpu_custom_call.1} parent=1 // loop_footer
      %s19 = sadd.s32 1, %s15
    $region7: #{tpu_custom_call.1} parent=1 // loop_footer_branch
      %14 = sbr.rel target = $region3
    $region8: #{tpu_custom_call.1} parent=1 // loop_exit
      _
    %224 = vsyncpa [#allocation7], 1
    %s225 = scalar_lea.sflag [#allocation7], 1
    %226 = vsyncpa %s225, 1
  %227 = vsyncmov [#allocation3]
  %s228 = vpop.sfrf %227
  %p229 = scmp.eq.s32.totalorder %s228, 0
  %p230 = pneg %p229
  %232 = shalt.err (%p230)
  %s233 = scalar_lea.sflag [#allocation3], 1
  %234 = vsyncmov %s233
  %s235 = vpop.sfrf %234
  %p236 = scmp.eq.s32.totalorder %s235, 0
  %p237 = pneg %p236
  %239 = shalt.err (%p237)
  %s240 = scalar_lea.sflag [#allocation3], 2
  %241 = vsyncmov %s240
  %s242 = vpop.sfrf %241
  %p243 = scmp.eq.s32.totalorder %s242, 0
  %p244 = pneg %p243
  %246 = shalt.err (%p244)
  %s247 = scalar_lea.sflag [#allocation3], 3
  %248 = vsyncmov %s247
  %s249 = vpop.sfrf %248
  %p250 = scmp.eq.s32.totalorder %s249, 0
  %p251 = pneg %p250
  %253 = shalt.err (%p251)
  %s254 = scalar_lea.sflag [#allocation3], 4
  %255 = vsyncmov %s254
  %s256 = vpop.sfrf %255
  %p257 = scmp.eq.s32.totalorder %s256, 0
  %p258 = pneg %p257
  %260 = shalt.err (%p258)
  %s261 = scalar_lea.sflag [#allocation3], 5
  %262 = vsyncmov %s261
  %s263 = vpop.sfrf %262
  %p264 = scmp.eq.s32.totalorder %s263, 0
  %p265 = pneg %p264
  %267 = shalt.err (%p265)
  %s268 = scalar_lea.sflag [#allocation3], 6
  %269 = vsyncmov %s268
  %s270 = vpop.sfrf %269
  %p271 = scmp.eq.s32.totalorder %s270, 0
  %p272 = pneg %p271
  %274 = shalt.err (%p272)
  %s275 = scalar_lea.sflag [#allocation3], 7
  %276 = vsyncmov %s275
  %s277 = vpop.sfrf %276
  %p278 = scmp.eq.s32.totalorder %s277, 0
  %p279 = pneg %p278
  %281 = shalt.err (%p279)

</llo_original>
